<compile_context>
chip_gen: v5e
topology: v5e:2x2
jax: 0.10.0
libtpu: 0.0.40
codegen_flags: <defaults>
</compile_context>

<pallas_src>
import jax
import jax.numpy as jnp
from jax import lax
from jax.experimental import pallas as pl
from jax.experimental.pallas import tpu as pltpu


# ---------------------------------------------------------------------------
# Kernel: one grid step == one chunk of Tc decode timesteps
# ---------------------------------------------------------------------------
def decoder_chunk_kernel(s0_ref, trg_ref, ctx_ref, wx_ref, wc_ref, ws_ref,
                         b_ref, out_ref, s_scr, pre_scr):
    """
    s0_ref  : [B, H]       f32   initial recurrent state (read only at chunk 0)
    trg_ref : [Tc, B, E]   f32   target-word embeddings for this chunk
    ctx_ref : [Tc, B, 2H]  f32   attention context for this chunk
    wx_ref  : [E, 2H]      bf16  fused trg weights  (cols 0:H reset, H:2H tilde)
    wc_ref  : [2H, 2H]     bf16  fused ctx weights
    ws_ref  : [H, 2H]      bf16  fused recurrent weights
    b_ref   : [1, 2H]      f32   pre-summed biases
    out_ref : [Tc, B, H]   f32   new state for every timestep of the chunk
    s_scr   : [B, H]       f32   recurrent state carried across chunks
    pre_scr : [Tc, B, 2H]  f32   hoisted non-recurrent pre-activations
    """
    Tc, B, E = trg_ref.shape
    H = s0_ref.shape[1]
    c = pl.program_id(0)

    @pl.when(c == 0)
    def _():
        s_scr[...] = s0_ref[...]

    # ---- Hoisted non-recurrent path: two M = Tc*B matmuls, bias folded in.
    trg = trg_ref[...].reshape(Tc * B, E).astype(jnp.bfloat16)
    ctx = ctx_ref[...].reshape(Tc * B, 2 * H).astype(jnp.bfloat16)
    pre_xc = (
        jnp.dot(trg, wx_ref[...], preferred_element_type=jnp.float32)
        + jnp.dot(ctx, wc_ref[...], preferred_element_type=jnp.float32)
        + b_ref[...]
    )                                           # [Tc*B, 2H] f32
    pre_scr[...] = pre_xc.reshape(Tc, B, 2 * H)

    # ---- Serial recurrence: only s@Ws + elementwise left in the chain.
    ws = ws_ref[...]                            # hoisted out of the loop

    def step(t, s):
        pre = pre_scr[t] + jnp.dot(s.astype(jnp.bfloat16), ws,
                                   preferred_element_type=jnp.float32)
        reset = jax.nn.sigmoid(pre[:, :H])      # reset gate (update half never computed)
        tilde = jnp.tanh(pre[:, H:])            # candidate state
        s_new = (1.0 - reset) * s + reset * tilde
        out_ref[t] = s_new                      # VMEM store; HBM writeback once per chunk
        return s_new

    s_final = lax.fori_loop(0, Tc, step, s_scr[...], unroll=True)
    s_scr[...] = s_final                        # carry state to the next chunk


# ---------------------------------------------------------------------------
# Wrappers
# ---------------------------------------------------------------------------
def decoder_sequence(trg_seq, prev_s, ctx_seq, fused, *, chunk=32):
    """Apply DecoderCell T times; weights stay VMEM-resident across all chunks.

    trg_seq : [T, B, E] f32,  prev_s : [B, H] f32,  ctx_seq : [T, B, 2H] f32
    returns : [T, B, H] f32  (state after each step)
    """
    T, B, E = trg_seq.shape
    H = prev_s.shape[1]

    Tc = min(T, chunk)
    n_chunks = pl.cdiv(T, Tc)
    T_pad = n_chunks * Tc
    if T_pad != T:
        # Zero-pad the tail chunk; padded steps only follow real steps, so the
        # real outputs are unaffected and the padded outputs are sliced off.
        pad = ((0, T_pad - T), (0, 0), (0, 0))
        trg_seq = jnp.pad(trg_seq, pad)
        ctx_seq = jnp.pad(ctx_seq, pad)

    grid_spec = pltpu.PrefetchScalarGridSpec(
        num_scalar_prefetch=0,
        grid=(n_chunks,),
        in_specs=[
            pl.BlockSpec((B, H), lambda c: (0, 0)),             # prev_s  (resident)
            pl.BlockSpec((Tc, B, E), lambda c: (c, 0, 0)),      # trg     (streamed)
            pl.BlockSpec((Tc, B, 2 * H), lambda c: (c, 0, 0)),  # ctx     (streamed)
            pl.BlockSpec((E, 2 * H), lambda c: (0, 0)),         # w_x     (resident)
            pl.BlockSpec((2 * H, 2 * H), lambda c: (0, 0)),     # w_c     (resident)
            pl.BlockSpec((H, 2 * H), lambda c: (0, 0)),         # w_s     (resident)
            pl.BlockSpec((1, 2 * H), lambda c: (0, 0)),         # bias    (resident)
        ],
        out_specs=pl.BlockSpec((Tc, B, H), lambda c: (c, 0, 0)),
        scratch_shapes=[
            pltpu.VMEM((B, H), jnp.float32),          # recurrent state (cross-chunk)
            pltpu.VMEM((Tc, B, 2 * H), jnp.float32),  # hoisted pre-activations
        ],
    )

    out = pl.pallas_call(
        decoder_chunk_kernel,
        out_shape=jax.ShapeDtypeStruct((T_pad, B, H), jnp.float32),
        grid_spec=grid_spec,
        compiler_params=pltpu.CompilerParams(
            # Recurrence across chunks is serial.  On v7x, independent
            # sequences/beams would be an additional leading "parallel" axis.
            dimension_semantics=("arbitrary",),
        ),
    )(prev_s, trg_seq, ctx_seq, fused["wx"], fused["wc"], fused["ws"], fused["b"])
    return out[:T]


def decoder_cell(trg_word, prev_s, ctx, fused):
    """Single-step API identical to the PyTorch DecoderCell.forward."""
    return decoder_sequence(trg_word[None], prev_s, ctx[None], fused)[0]


# ---------------------------------------------------------------------------
# Parameters (original per-Linear layout) + fusion
# ---------------------------------------------------------------------------
def init_params(key, embed_dim, hidden_dim):
    """Synthetic params matching DecoderCell.__init__; weights stored [in,out]."""
    def linear(k, fan_in, fan_out):
        kw, kb = jax.random.split(k)
        bound = 1.0 / jnp.sqrt(fan_in)
        w = jax.random.uniform(kw, (fan_in, fan_out), jnp.float32, -bound, bound)
        b = jax.random.uniform(kb, (1, fan_out), jnp.float32, -bound, bound)
        return w, b

    ks = jax.random.split(key, 6)
    E, H = embed_dim, hidden_dim
    wig, big = linear(ks[0], E, 2 * H)       # input_weights
    whg, bhg = linear(ks[1], H, 2 * H)       # hidden_weights
    wcg, bcg = linear(ks[2], 2 * H, 2 * H)   # ctx_weights
    wii, bii = linear(ks[3], E, H)           # input_in
    whi, bhi = linear(ks[4], H, H)           # hidden_in
    wci, bci = linear(ks[5], 2 * H, H)       # ctx_in
    return dict(wig=wig, big=big, whg=whg, bhg=bhg, wcg=wcg, bcg=bcg,
                wii=wii, bii=bii, whi=whi, bhi=bhi, wci=wci, bci=bci)


def fuse_params(p, embed_dim, hidden_dim):
    """Drop the unused update-gate half, fuse along N, pre-sum biases, bf16 weights.

    Output columns 0:H   -> reset-gate path
    Output columns H:2H  -> candidate-state path
    """
    H = hidden_dim
    wx = jnp.concatenate([p["wig"][:, :H], p["wii"]], axis=1).astype(jnp.bfloat16)  # [E,  2H]
    wc = jnp.concatenate([p["wcg"][:, :H], p["wci"]], axis=1).astype(jnp.bfloat16)  # [2H, 2H]
    ws = jnp.concatenate([p["whg"][:, :H], p["whi"]], axis=1).astype(jnp.bfloat16)  # [H,  2H]
    b = jnp.concatenate(
        [
            p["big"][:, :H] + p["bhg"][:, :H] + p["bcg"][:, :H],
            p["bii"] + p["bhi"] + p["bci"],
        ],
        axis=1,
    ).astype(jnp.float32)                                                           # [1, 2H]
    return dict(wx=wx, wc=wc, ws=ws, b=b)


# ---------------------------------------------------------------------------
# Pure-JAX references
# ---------------------------------------------------------------------------
def decoder_cell_ref_f32(x, s, c, p):
    """Literal (f32) PyTorch DecoderCell.forward."""
    gates = (x @ p["wig"] + p["big"]
             + s @ p["whg"] + p["bhg"]
             + c @ p["wcg"] + p["bcg"])
    H = s.shape[1]
    reset = jax.nn.sigmoid(gates[:, :H])
    tilde = jnp.tanh(x @ p["wii"] + p["bii"]
                     + s @ p["whi"] + p["bhi"]
                     + c @ p["wci"] + p["bci"])
    return (1.0 - reset) * s + reset * tilde


def decoder_seq_ref_mixed(trg_seq, prev_s, ctx_seq, fused):
    """Reference using the same bf16/f32 mixed precision + association as the kernel."""
    H = prev_s.shape[1]

    def step(s, xc):
        x_t, c_t = xc
        pre_xc = (jnp.dot(x_t.astype(jnp.bfloat16), fused["wx"],
                          preferred_element_type=jnp.float32)
                  + jnp.dot(c_t.astype(jnp.bfloat16), fused["wc"],
                            preferred_element_type=jnp.float32)
                  + fused["b"])
        pre = pre_xc + jnp.dot(s.astype(jnp.bfloat16), fused["ws"],
                               preferred_element_type=jnp.float32)
        reset = jax.nn.sigmoid(pre[:, :H])
        tilde = jnp.tanh(pre[:, H:])
        s_new = (1.0 - reset) * s + reset * tilde
        return s_new, s_new

    _, outs = lax.scan(step, prev_s, (trg_seq, ctx_seq))
    return outs


# ---------------------------------------------------------------------------
if __name__ == "__main__":
    B, E, H, T = 8, 32, 64, 8   # batch, embed_dim, hidden_dim, decode steps

    key = jax.random.PRNGKey(0)
    k_in, k_par = jax.random.split(key)
    kx, ks, kc = jax.random.split(k_in, 3)

    trg_seq = jax.random.normal(kx, (T, B, E), jnp.float32)
    prev_s = jax.random.normal(ks, (B, H), jnp.float32)
    ctx_seq = jax.random.normal(kc, (T, B, 2 * H), jnp.float32)

    params = init_params(k_par, E, H)
    fused = fuse_params(params, E, H)

    out_seq = jax.block_until_ready(decoder_sequence(trg_seq, prev_s, ctx_seq, fused))
    assert out_seq.shape == (T, B, H)

    # Tight check: same math / same mixed precision as the kernel.
    ref_mixed = decoder_seq_ref_mixed(trg_seq, prev_s, ctx_seq, fused)
    err = float(jnp.max(jnp.abs(out_seq - ref_mixed)))
    assert jnp.allclose(out_seq, ref_mixed, atol=2e-3, rtol=2e-3), err

    # Cross-chunk state carry + ragged-T tail padding (T=8 split into chunks of 3).
    out_chunked = jax.block_until_ready(
        decoder_sequence(trg_seq, prev_s, ctx_seq, fused, chunk=3))
    err_c = float(jnp.max(jnp.abs(out_chunked - ref_mixed)))
    assert jnp.allclose(out_chunked, ref_mixed, atol=2e-3, rtol=2e-3), err_c

    # Loose check: literal f32 PyTorch forward iterated over T steps
    # (differences come only from bf16 weight/activation rounding).
    s = prev_s
    refs = []
    for t in range(T):
        s = decoder_cell_ref_f32(trg_seq[t], s, ctx_seq[t], params)
        refs.append(s)
    ref_f32 = jnp.stack(refs)
    assert jnp.allclose(out_seq, ref_f32, atol=5e-2, rtol=5e-2)

    # Single-step API (exactly the module's forward signature).
    out_1 = jax.block_until_ready(decoder_cell(trg_seq[0], prev_s, ctx_seq[0], fused))
    assert out_1.shape == (B, H)
    assert jnp.allclose(out_1, ref_f32[0], atol=5e-2, rtol=5e-2)

    print("KERNEL_OK")
</pallas_src>

<mosaic_0001>
module attributes {stable_mosaic.version = 11 : i64} {
  func.func @decoder_chunk_kernel(%arg0: i32, %arg1: memref<8x64xf32, #tpu.memory_space<vmem>>, %arg2: memref<8x8x32xf32, #tpu.memory_space<vmem>>, %arg3: memref<8x8x128xf32, #tpu.memory_space<vmem>>, %arg4: memref<32x128xbf16, #tpu.memory_space<vmem>>, %arg5: memref<128x128xbf16, #tpu.memory_space<vmem>>, %arg6: memref<64x128xbf16, #tpu.memory_space<vmem>>, %arg7: memref<1x128xf32, #tpu.memory_space<vmem>>, %arg8: memref<8x8x64xf32, #tpu.memory_space<vmem>>, %arg9: memref<8x64xf32, #tpu.memory_space<vmem>>, %arg10: memref<8x8x128xf32, #tpu.memory_space<vmem>>) attributes {dimension_semantics = [#tpu.dimension_semantics<arbitrary>], iteration_bounds = array<i64: 1>, scalar_prefetch = 0 : i64, scratch_operands = 2 : i64, tpu.core_type = #tpu.core_type<tc>, window_params = [{pipeline_mode = #tpu.pipeline_mode<synchronous>, transform_indices = @transform_0, window_bounds = array<i64: 8, 64>}, {transform_indices = @transform_1, window_bounds = array<i64: 8, 8, 32>}, {transform_indices = @transform_2, window_bounds = array<i64: 8, 8, 128>}, {pipeline_mode = #tpu.pipeline_mode<synchronous>, transform_indices = @transform_3, window_bounds = array<i64: 32, 128>}, {pipeline_mode = #tpu.pipeline_mode<synchronous>, transform_indices = @transform_4, window_bounds = array<i64: 128, 128>}, {pipeline_mode = #tpu.pipeline_mode<synchronous>, transform_indices = @transform_5, window_bounds = array<i64: 64, 128>}, {pipeline_mode = #tpu.pipeline_mode<synchronous>, transform_indices = @transform_6, window_bounds = array<i64: 1, 128>}, {transform_indices = @transform_7, window_bounds = array<i64: 8, 8, 64>}]} {
    %c0_i32 = arith.constant 0 : i32
    %0 = arith.cmpi eq, %arg0, %c0_i32 : i32
    %1 = arith.extui %0 : i1 to i32
    %c0_i32_0 = arith.constant 0 : i32
    %2 = arith.cmpi ne, %1, %c0_i32_0 : i32
    scf.if %2 {
      %c0_79 = arith.constant 0 : index
      %c0_80 = arith.constant 0 : index
      %206 = vector.load %arg1[%c0_79, %c0_80] : memref<8x64xf32, #tpu.memory_space<vmem>>, vector<8x64xf32>
      %c0_81 = arith.constant 0 : index
      %c0_82 = arith.constant 0 : index
      %207 = vector.load %arg9[%c0_81, %c0_82] : memref<8x64xf32, #tpu.memory_space<vmem>>, vector<8x64xf32>
      tpu.vector_store %arg9[%c0_81, %c0_82], %206 {strides = array<i32>} : memref<8x64xf32, #tpu.memory_space<vmem>>, vector<8x64xf32>,
    } else {
    }
    %c0 = arith.constant 0 : index
    %c0_1 = arith.constant 0 : index
    %c0_2 = arith.constant 0 : index
    %3 = vector.load %arg2[%c0, %c0_1, %c0_2] : memref<8x8x32xf32, #tpu.memory_space<vmem>>, vector<8x8x32xf32>
    %4 = vector.shape_cast %3 : vector<8x8x32xf32> to vector<64x32xf32>
    %5 = arith.truncf %4 : vector<64x32xf32> to vector<64x32xbf16>
    %c0_3 = arith.constant 0 : index
    %c0_4 = arith.constant 0 : index
    %c0_5 = arith.constant 0 : index
    %6 = vector.load %arg3[%c0_3, %c0_4, %c0_5] : memref<8x8x128xf32, #tpu.memory_space<vmem>>, vector<8x8x128xf32>
    %7 = vector.shape_cast %6 : vector<8x8x128xf32> to vector<64x128xf32>
    %8 = arith.truncf %7 : vector<64x128xf32> to vector<64x128xbf16>
    %c0_6 = arith.constant 0 : index
    %c0_7 = arith.constant 0 : index
    %9 = vector.load %arg4[%c0_6, %c0_7] : memref<32x128xbf16, #tpu.memory_space<vmem>>, vector<32x128xbf16>
    %cst = arith.constant dense<0.000000e+00> : vector<64x128xf32>
    %10 = tpu.matmul %5, %9, %cst {dimension_numbers = #tpu.dot_dimension_numbers<[1], [0], [0], [1], [0, 0, 1, 1], [], []>} : vector<64x32xbf16>, vector<32x128xbf16>, vector<64x128xf32> -> vector<64x128xf32>
    %c0_8 = arith.constant 0 : index
    %c0_9 = arith.constant 0 : index
    %11 = vector.load %arg5[%c0_8, %c0_9] : memref<128x128xbf16, #tpu.memory_space<vmem>>, vector<128x128xbf16>
    %cst_10 = arith.constant dense<0.000000e+00> : vector<64x128xf32>
    %12 = tpu.matmul %8, %11, %cst_10 {dimension_numbers = #tpu.dot_dimension_numbers<[1], [0], [0], [1], [0, 0, 1, 1], [], []>} : vector<64x128xbf16>, vector<128x128xbf16>, vector<64x128xf32> -> vector<64x128xf32>
    %13 = arith.addf %10, %12 : vector<64x128xf32>
    %c0_11 = arith.constant 0 : index
    %c0_12 = arith.constant 0 : index
    %14 = vector.load %arg7[%c0_11, %c0_12] : memref<1x128xf32, #tpu.memory_space<vmem>>, vector<1x128xf32>
    %15 = vector.broadcast %14 : vector<1x128xf32> to vector<64x128xf32>
    %16 = arith.addf %13, %15 : vector<64x128xf32>
    %17 = vector.shape_cast %16 : vector<64x128xf32> to vector<8x8x128xf32>
    %c0_13 = arith.constant 0 : index
    %c0_14 = arith.constant 0 : index
    %c0_15 = arith.constant 0 : index
    %18 = vector.load %arg10[%c0_13, %c0_14, %c0_15] : memref<8x8x128xf32, #tpu.memory_space<vmem>>, vector<8x8x128xf32>
    tpu.vector_store %arg10[%c0_13, %c0_14, %c0_15], %17 {strides = array<i32>} : memref<8x8x128xf32, #tpu.memory_space<vmem>>, vector<8x8x128xf32>,
    %c0_16 = arith.constant 0 : index
    %c0_17 = arith.constant 0 : index
    %19 = vector.load %arg6[%c0_16, %c0_17] : memref<64x128xbf16, #tpu.memory_space<vmem>>, vector<64x128xbf16>
    %c0_18 = arith.constant 0 : index
    %c0_19 = arith.constant 0 : index
    %20 = vector.load %arg9[%c0_18, %c0_19] : memref<8x64xf32, #tpu.memory_space<vmem>>, vector<8x64xf32>
    %c0_i32_20 = arith.constant 0 : i32
    %21 = arith.index_cast %c0_i32_20 : i32 to index
    %c0_21 = arith.constant 0 : index
    %c0_22 = arith.constant 0 : index
    %22 = vector.load %arg10[%21, %c0_21, %c0_22] : memref<8x8x128xf32, #tpu.memory_space<vmem>>, vector<1x8x128xf32>
    %23 = vector.shape_cast %22 : vector<1x8x128xf32> to vector<8x128xf32>
    %24 = arith.truncf %20 : vector<8x64xf32> to vector<8x64xbf16>
    %cst_23 = arith.constant dense<0.000000e+00> : vector<8x128xf32>
    %25 = tpu.matmul %24, %19, %cst_23 {dimension_numbers = #tpu.dot_dimension_numbers<[1], [0], [0], [1], [0, 0, 1, 1], [], []>} : vector<8x64xbf16>, vector<64x128xbf16>, vector<8x128xf32> -> vector<8x128xf32>
    %26 = arith.addf %23, %25 : vector<8x128xf32>
    %27 = vector.extract_strided_slice %26 {offsets = [0, 0], sizes = [8, 64], strides = [1, 1]} : vector<8x128xf32> to vector<8x64xf32>
    %28 = arith.negf %27 : vector<8x64xf32>
    %29 = math.exp %28 : vector<8x64xf32>
    %cst_24 = arith.constant 1.000000e+00 : f32
    %30 = vector.broadcast %cst_24 : f32 to vector<8x64xf32>
    %31 = arith.addf %30, %29 : vector<8x64xf32>
    %32 = arith.divf %30, %31 : vector<8x64xf32>
    %33 = vector.extract_strided_slice %26 {offsets = [0, 64], sizes = [8, 64], strides = [1, 1]} : vector<8x128xf32> to vector<8x64xf32>
    %34 = math.tanh %33 : vector<8x64xf32>
    %cst_25 = arith.constant 1.000000e+00 : f32
    %35 = vector.broadcast %cst_25 : f32 to vector<8x64xf32>
    %36 = arith.subf %35, %32 : vector<8x64xf32>
    %37 = arith.mulf %36, %20 : vector<8x64xf32>
    %38 = arith.mulf %32, %34 : vector<8x64xf32>
    %39 = arith.addf %37, %38 : vector<8x64xf32>
    %40 = arith.index_cast %c0_i32_20 : i32 to index
    %c0_26 = arith.constant 0 : index
    %c0_27 = arith.constant 0 : index
    %41 = vector.load %arg8[%40, %c0_26, %c0_27] : memref<8x8x64xf32, #tpu.memory_space<vmem>>, vector<1x8x64xf32>
    %42 = vector.shape_cast %41 : vector<1x8x64xf32> to vector<8x64xf32>
    %43 = vector.shape_cast %39 : vector<8x64xf32> to vector<1x8x64xf32>
    tpu.vector_store %arg8[%40, %c0_26, %c0_27], %43 {strides = array<i32>} : memref<8x8x64xf32, #tpu.memory_space<vmem>>, vector<1x8x64xf32>,
    %c1_i32 = arith.constant 1 : i32
    %44 = arith.index_cast %c1_i32 : i32 to index
    %c0_28 = arith.constant 0 : index
    %c0_29 = arith.constant 0 : index
    %45 = vector.load %arg10[%44, %c0_28, %c0_29] : memref<8x8x128xf32, #tpu.memory_space<vmem>>, vector<1x8x128xf32>
    %46 = vector.shape_cast %45 : vector<1x8x128xf32> to vector<8x128xf32>
    %47 = arith.truncf %39 : vector<8x64xf32> to vector<8x64xbf16>
    %cst_30 = arith.constant dense<0.000000e+00> : vector<8x128xf32>
    %48 = tpu.matmul %47, %19, %cst_30 {dimension_numbers = #tpu.dot_dimension_numbers<[1], [0], [0], [1], [0, 0, 1, 1], [], []>} : vector<8x64xbf16>, vector<64x128xbf16>, vector<8x128xf32> -> vector<8x128xf32>
    %49 = arith.addf %46, %48 : vector<8x128xf32>
    %50 = vector.extract_strided_slice %49 {offsets = [0, 0], sizes = [8, 64], strides = [1, 1]} : vector<8x128xf32> to vector<8x64xf32>
    %51 = arith.negf %50 : vector<8x64xf32>
    %52 = math.exp %51 : vector<8x64xf32>
    %cst_31 = arith.constant 1.000000e+00 : f32
    %53 = vector.broadcast %cst_31 : f32 to vector<8x64xf32>
    %54 = arith.addf %53, %52 : vector<8x64xf32>
    %55 = arith.divf %53, %54 : vector<8x64xf32>
    %56 = vector.extract_strided_slice %49 {offsets = [0, 64], sizes = [8, 64], strides = [1, 1]} : vector<8x128xf32> to vector<8x64xf32>
    %57 = math.tanh %56 : vector<8x64xf32>
    %cst_32 = arith.constant 1.000000e+00 : f32
    %58 = vector.broadcast %cst_32 : f32 to vector<8x64xf32>
    %59 = arith.subf %58, %55 : vector<8x64xf32>
    %60 = arith.mulf %59, %39 : vector<8x64xf32>
    %61 = arith.mulf %55, %57 : vector<8x64xf32>
    %62 = arith.addf %60, %61 : vector<8x64xf32>
    %63 = arith.index_cast %c1_i32 : i32 to index
    %c0_33 = arith.constant 0 : index
    %c0_34 = arith.constant 0 : index
    %64 = vector.load %arg8[%63, %c0_33, %c0_34] : memref<8x8x64xf32, #tpu.memory_space<vmem>>, vector<1x8x64xf32>
    %65 = vector.shape_cast %64 : vector<1x8x64xf32> to vector<8x64xf32>
    %66 = vector.shape_cast %62 : vector<8x64xf32> to vector<1x8x64xf32>
    tpu.vector_store %arg8[%63, %c0_33, %c0_34], %66 {strides = array<i32>} : memref<8x8x64xf32, #tpu.memory_space<vmem>>, vector<1x8x64xf32>,
    %c2_i32 = arith.constant 2 : i32
    %67 = arith.index_cast %c2_i32 : i32 to index
    %c0_35 = arith.constant 0 : index
    %c0_36 = arith.constant 0 : index
    %68 = vector.load %arg10[%67, %c0_35, %c0_36] : memref<8x8x128xf32, #tpu.memory_space<vmem>>, vector<1x8x128xf32>
    %69 = vector.shape_cast %68 : vector<1x8x128xf32> to vector<8x128xf32>
    %70 = arith.truncf %62 : vector<8x64xf32> to vector<8x64xbf16>
    %cst_37 = arith.constant dense<0.000000e+00> : vector<8x128xf32>
    %71 = tpu.matmul %70, %19, %cst_37 {dimension_numbers = #tpu.dot_dimension_numbers<[1], [0], [0], [1], [0, 0, 1, 1], [], []>} : vector<8x64xbf16>, vector<64x128xbf16>, vector<8x128xf32> -> vector<8x128xf32>
    %72 = arith.addf %69, %71 : vector<8x128xf32>
    %73 = vector.extract_strided_slice %72 {offsets = [0, 0], sizes = [8, 64], strides = [1, 1]} : vector<8x128xf32> to vector<8x64xf32>
    %74 = arith.negf %73 : vector<8x64xf32>
    %75 = math.exp %74 : vector<8x64xf32>
    %cst_38 = arith.constant 1.000000e+00 : f32
    %76 = vector.broadcast %cst_38 : f32 to vector<8x64xf32>
    %77 = arith.addf %76, %75 : vector<8x64xf32>
    %78 = arith.divf %76, %77 : vector<8x64xf32>
    %79 = vector.extract_strided_slice %72 {offsets = [0, 64], sizes = [8, 64], strides = [1, 1]} : vector<8x128xf32> to vector<8x64xf32>
    %80 = math.tanh %79 : vector<8x64xf32>
    %cst_39 = arith.constant 1.000000e+00 : f32
    %81 = vector.broadcast %cst_39 : f32 to vector<8x64xf32>
    %82 = arith.subf %81, %78 : vector<8x64xf32>
    %83 = arith.mulf %82, %62 : vector<8x64xf32>
    %84 = arith.mulf %78, %80 : vector<8x64xf32>
    %85 = arith.addf %83, %84 : vector<8x64xf32>
    %86 = arith.index_cast %c2_i32 : i32 to index
    %c0_40 = arith.constant 0 : index
    %c0_41 = arith.constant 0 : index
    %87 = vector.load %arg8[%86, %c0_40, %c0_41] : memref<8x8x64xf32, #tpu.memory_space<vmem>>, vector<1x8x64xf32>
    %88 = vector.shape_cast %87 : vector<1x8x64xf32> to vector<8x64xf32>
    %89 = vector.shape_cast %85 : vector<8x64xf32> to vector<1x8x64xf32>
    tpu.vector_store %arg8[%86, %c0_40, %c0_41], %89 {strides = array<i32>} : memref<8x8x64xf32, #tpu.memory_space<vmem>>, vector<1x8x64xf32>,
    %c3_i32 = arith.constant 3 : i32
    %90 = arith.index_cast %c3_i32 : i32 to index
    %c0_42 = arith.constant 0 : index
    %c0_43 = arith.constant 0 : index
    %91 = vector.load %arg10[%90, %c0_42, %c0_43] : memref<8x8x128xf32, #tpu.memory_space<vmem>>, vector<1x8x128xf32>
    %92 = vector.shape_cast %91 : vector<1x8x128xf32> to vector<8x128xf32>
    %93 = arith.truncf %85 : vector<8x64xf32> to vector<8x64xbf16>
    %cst_44 = arith.constant dense<0.000000e+00> : vector<8x128xf32>
    %94 = tpu.matmul %93, %19, %cst_44 {dimension_numbers = #tpu.dot_dimension_numbers<[1], [0], [0], [1], [0, 0, 1, 1], [], []>} : vector<8x64xbf16>, vector<64x128xbf16>, vector<8x128xf32> -> vector<8x128xf32>
    %95 = arith.addf %92, %94 : vector<8x128xf32>
    %96 = vector.extract_strided_slice %95 {offsets = [0, 0], sizes = [8, 64], strides = [1, 1]} : vector<8x128xf32> to vector<8x64xf32>
    %97 = arith.negf %96 : vector<8x64xf32>
    %98 = math.exp %97 : vector<8x64xf32>
    %cst_45 = arith.constant 1.000000e+00 : f32
    %99 = vector.broadcast %cst_45 : f32 to vector<8x64xf32>
    %100 = arith.addf %99, %98 : vector<8x64xf32>
    %101 = arith.divf %99, %100 : vector<8x64xf32>
    %102 = vector.extract_strided_slice %95 {offsets = [0, 64], sizes = [8, 64], strides = [1, 1]} : vector<8x128xf32> to vector<8x64xf32>
    %103 = math.tanh %102 : vector<8x64xf32>
    %cst_46 = arith.constant 1.000000e+00 : f32
    %104 = vector.broadcast %cst_46 : f32 to vector<8x64xf32>
    %105 = arith.subf %104, %101 : vector<8x64xf32>
    %106 = arith.mulf %105, %85 : vector<8x64xf32>
    %107 = arith.mulf %101, %103 : vector<8x64xf32>
    %108 = arith.addf %106, %107 : vector<8x64xf32>
    %109 = arith.index_cast %c3_i32 : i32 to index
    %c0_47 = arith.constant 0 : index
    %c0_48 = arith.constant 0 : index
    %110 = vector.load %arg8[%109, %c0_47, %c0_48] : memref<8x8x64xf32, #tpu.memory_space<vmem>>, vector<1x8x64xf32>
    %111 = vector.shape_cast %110 : vector<1x8x64xf32> to vector<8x64xf32>
    %112 = vector.shape_cast %108 : vector<8x64xf32> to vector<1x8x64xf32>
    tpu.vector_store %arg8[%109, %c0_47, %c0_48], %112 {strides = array<i32>} : memref<8x8x64xf32, #tpu.memory_space<vmem>>, vector<1x8x64xf32>,
    %c4_i32 = arith.constant 4 : i32
    %113 = arith.index_cast %c4_i32 : i32 to index
    %c0_49 = arith.constant 0 : index
    %c0_50 = arith.constant 0 : index
    %114 = vector.load %arg10[%113, %c0_49, %c0_50] : memref<8x8x128xf32, #tpu.memory_space<vmem>>, vector<1x8x128xf32>
    %115 = vector.shape_cast %114 : vector<1x8x128xf32> to vector<8x128xf32>
    %116 = arith.truncf %108 : vector<8x64xf32> to vector<8x64xbf16>
    %cst_51 = arith.constant dense<0.000000e+00> : vector<8x128xf32>
    %117 = tpu.matmul %116, %19, %cst_51 {dimension_numbers = #tpu.dot_dimension_numbers<[1], [0], [0], [1], [0, 0, 1, 1], [], []>} : vector<8x64xbf16>, vector<64x128xbf16>, vector<8x128xf32> -> vector<8x128xf32>
    %118 = arith.addf %115, %117 : vector<8x128xf32>
    %119 = vector.extract_strided_slice %118 {offsets = [0, 0], sizes = [8, 64], strides = [1, 1]} : vector<8x128xf32> to vector<8x64xf32>
    %120 = arith.negf %119 : vector<8x64xf32>
    %121 = math.exp %120 : vector<8x64xf32>
    %cst_52 = arith.constant 1.000000e+00 : f32
    %122 = vector.broadcast %cst_52 : f32 to vector<8x64xf32>
    %123 = arith.addf %122, %121 : vector<8x64xf32>
    %124 = arith.divf %122, %123 : vector<8x64xf32>
    %125 = vector.extract_strided_slice %118 {offsets = [0, 64], sizes = [8, 64], strides = [1, 1]} : vector<8x128xf32> to vector<8x64xf32>
    %126 = math.tanh %125 : vector<8x64xf32>
    %cst_53 = arith.constant 1.000000e+00 : f32
    %127 = vector.broadcast %cst_53 : f32 to vector<8x64xf32>
    %128 = arith.subf %127, %124 : vector<8x64xf32>
    %129 = arith.mulf %128, %108 : vector<8x64xf32>
    %130 = arith.mulf %124, %126 : vector<8x64xf32>
    %131 = arith.addf %129, %130 : vector<8x64xf32>
    %132 = arith.index_cast %c4_i32 : i32 to index
    %c0_54 = arith.constant 0 : index
    %c0_55 = arith.constant 0 : index
    %133 = vector.load %arg8[%132, %c0_54, %c0_55] : memref<8x8x64xf32, #tpu.memory_space<vmem>>, vector<1x8x64xf32>
    %134 = vector.shape_cast %133 : vector<1x8x64xf32> to vector<8x64xf32>
    %135 = vector.shape_cast %131 : vector<8x64xf32> to vector<1x8x64xf32>
    tpu.vector_store %arg8[%132, %c0_54, %c0_55], %135 {strides = array<i32>} : memref<8x8x64xf32, #tpu.memory_space<vmem>>, vector<1x8x64xf32>,
    %c5_i32 = arith.constant 5 : i32
    %136 = arith.index_cast %c5_i32 : i32 to index
    %c0_56 = arith.constant 0 : index
    %c0_57 = arith.constant 0 : index
    %137 = vector.load %arg10[%136, %c0_56, %c0_57] : memref<8x8x128xf32, #tpu.memory_space<vmem>>, vector<1x8x128xf32>
    %138 = vector.shape_cast %137 : vector<1x8x128xf32> to vector<8x128xf32>
    %139 = arith.truncf %131 : vector<8x64xf32> to vector<8x64xbf16>
    %cst_58 = arith.constant dense<0.000000e+00> : vector<8x128xf32>
    %140 = tpu.matmul %139, %19, %cst_58 {dimension_numbers = #tpu.dot_dimension_numbers<[1], [0], [0], [1], [0, 0, 1, 1], [], []>} : vector<8x64xbf16>, vector<64x128xbf16>, vector<8x128xf32> -> vector<8x128xf32>
    %141 = arith.addf %138, %140 : vector<8x128xf32>
    %142 = vector.extract_strided_slice %141 {offsets = [0, 0], sizes = [8, 64], strides = [1, 1]} : vector<8x128xf32> to vector<8x64xf32>
    %143 = arith.negf %142 : vector<8x64xf32>
    %144 = math.exp %143 : vector<8x64xf32>
    %cst_59 = arith.constant 1.000000e+00 : f32
    %145 = vector.broadcast %cst_59 : f32 to vector<8x64xf32>
    %146 = arith.addf %145, %144 : vector<8x64xf32>
    %147 = arith.divf %145, %146 : vector<8x64xf32>
    %148 = vector.extract_strided_slice %141 {offsets = [0, 64], sizes = [8, 64], strides = [1, 1]} : vector<8x128xf32> to vector<8x64xf32>
    %149 = math.tanh %148 : vector<8x64xf32>
    %cst_60 = arith.constant 1.000000e+00 : f32
    %150 = vector.broadcast %cst_60 : f32 to vector<8x64xf32>
    %151 = arith.subf %150, %147 : vector<8x64xf32>
    %152 = arith.mulf %151, %131 : vector<8x64xf32>
    %153 = arith.mulf %147, %149 : vector<8x64xf32>
    %154 = arith.addf %152, %153 : vector<8x64xf32>
    %155 = arith.index_cast %c5_i32 : i32 to index
    %c0_61 = arith.constant 0 : index
    %c0_62 = arith.constant 0 : index
    %156 = vector.load %arg8[%155, %c0_61, %c0_62] : memref<8x8x64xf32, #tpu.memory_space<vmem>>, vector<1x8x64xf32>
    %157 = vector.shape_cast %156 : vector<1x8x64xf32> to vector<8x64xf32>
    %158 = vector.shape_cast %154 : vector<8x64xf32> to vector<1x8x64xf32>
    tpu.vector_store %arg8[%155, %c0_61, %c0_62], %158 {strides = array<i32>} : memref<8x8x64xf32, #tpu.memory_space<vmem>>, vector<1x8x64xf32>,
    %c6_i32 = arith.constant 6 : i32
    %159 = arith.index_cast %c6_i32 : i32 to index
    %c0_63 = arith.constant 0 : index
    %c0_64 = arith.constant 0 : index
    %160 = vector.load %arg10[%159, %c0_63, %c0_64] : memref<8x8x128xf32, #tpu.memory_space<vmem>>, vector<1x8x128xf32>
    %161 = vector.shape_cast %160 : vector<1x8x128xf32> to vector<8x128xf32>
    %162 = arith.truncf %154 : vector<8x64xf32> to vector<8x64xbf16>
    %cst_65 = arith.constant dense<0.000000e+00> : vector<8x128xf32>
    %163 = tpu.matmul %162, %19, %cst_65 {dimension_numbers = #tpu.dot_dimension_numbers<[1], [0], [0], [1], [0, 0, 1, 1], [], []>} : vector<8x64xbf16>, vector<64x128xbf16>, vector<8x128xf32> -> vector<8x128xf32>
    %164 = arith.addf %161, %163 : vector<8x128xf32>
    %165 = vector.extract_strided_slice %164 {offsets = [0, 0], sizes = [8, 64], strides = [1, 1]} : vector<8x128xf32> to vector<8x64xf32>
    %166 = arith.negf %165 : vector<8x64xf32>
    %167 = math.exp %166 : vector<8x64xf32>
    %cst_66 = arith.constant 1.000000e+00 : f32
    %168 = vector.broadcast %cst_66 : f32 to vector<8x64xf32>
    %169 = arith.addf %168, %167 : vector<8x64xf32>
    %170 = arith.divf %168, %169 : vector<8x64xf32>
    %171 = vector.extract_strided_slice %164 {offsets = [0, 64], sizes = [8, 64], strides = [1, 1]} : vector<8x128xf32> to vector<8x64xf32>
    %172 = math.tanh %171 : vector<8x64xf32>
    %cst_67 = arith.constant 1.000000e+00 : f32
    %173 = vector.broadcast %cst_67 : f32 to vector<8x64xf32>
    %174 = arith.subf %173, %170 : vector<8x64xf32>
    %175 = arith.mulf %174, %154 : vector<8x64xf32>
    %176 = arith.mulf %170, %172 : vector<8x64xf32>
    %177 = arith.addf %175, %176 : vector<8x64xf32>
    %178 = arith.index_cast %c6_i32 : i32 to index
    %c0_68 = arith.constant 0 : index
    %c0_69 = arith.constant 0 : index
    %179 = vector.load %arg8[%178, %c0_68, %c0_69] : memref<8x8x64xf32, #tpu.memory_space<vmem>>, vector<1x8x64xf32>
    %180 = vector.shape_cast %179 : vector<1x8x64xf32> to vector<8x64xf32>
    %181 = vector.shape_cast %177 : vector<8x64xf32> to vector<1x8x64xf32>
    tpu.vector_store %arg8[%178, %c0_68, %c0_69], %181 {strides = array<i32>} : memref<8x8x64xf32, #tpu.memory_space<vmem>>, vector<1x8x64xf32>,
    %c7_i32 = arith.constant 7 : i32
    %182 = arith.index_cast %c7_i32 : i32 to index
    %c0_70 = arith.constant 0 : index
    %c0_71 = arith.constant 0 : index
    %183 = vector.load %arg10[%182, %c0_70, %c0_71] : memref<8x8x128xf32, #tpu.memory_space<vmem>>, vector<1x8x128xf32>
    %184 = vector.shape_cast %183 : vector<1x8x128xf32> to vector<8x128xf32>
    %185 = arith.truncf %177 : vector<8x64xf32> to vector<8x64xbf16>
    %cst_72 = arith.constant dense<0.000000e+00> : vector<8x128xf32>
    %186 = tpu.matmul %185, %19, %cst_72 {dimension_numbers = #tpu.dot_dimension_numbers<[1], [0], [0], [1], [0, 0, 1, 1], [], []>} : vector<8x64xbf16>, vector<64x128xbf16>, vector<8x128xf32> -> vector<8x128xf32>
    %187 = arith.addf %184, %186 : vector<8x128xf32>
    %188 = vector.extract_strided_slice %187 {offsets = [0, 0], sizes = [8, 64], strides = [1, 1]} : vector<8x128xf32> to vector<8x64xf32>
    %189 = arith.negf %188 : vector<8x64xf32>
    %190 = math.exp %189 : vector<8x64xf32>
    %cst_73 = arith.constant 1.000000e+00 : f32
    %191 = vector.broadcast %cst_73 : f32 to vector<8x64xf32>
    %192 = arith.addf %191, %190 : vector<8x64xf32>
    %193 = arith.divf %191, %192 : vector<8x64xf32>
    %194 = vector.extract_strided_slice %187 {offsets = [0, 64], sizes = [8, 64], strides = [1, 1]} : vector<8x128xf32> to vector<8x64xf32>
    %195 = math.tanh %194 : vector<8x64xf32>
    %cst_74 = arith.constant 1.000000e+00 : f32
    %196 = vector.broadcast %cst_74 : f32 to vector<8x64xf32>
    %197 = arith.subf %196, %193 : vector<8x64xf32>
    %198 = arith.mulf %197, %177 : vector<8x64xf32>
    %199 = arith.mulf %193, %195 : vector<8x64xf32>
    %200 = arith.addf %198, %199 : vector<8x64xf32>
    %201 = arith.index_cast %c7_i32 : i32 to index
    %c0_75 = arith.constant 0 : index
    %c0_76 = arith.constant 0 : index
    %202 = vector.load %arg8[%201, %c0_75, %c0_76] : memref<8x8x64xf32, #tpu.memory_space<vmem>>, vector<1x8x64xf32>
    %203 = vector.shape_cast %202 : vector<1x8x64xf32> to vector<8x64xf32>
    %204 = vector.shape_cast %200 : vector<8x64xf32> to vector<1x8x64xf32>
    tpu.vector_store %arg8[%201, %c0_75, %c0_76], %204 {strides = array<i32>} : memref<8x8x64xf32, #tpu.memory_space<vmem>>, vector<1x8x64xf32>,
    %c8_i32 = arith.constant 8 : i32
    %c0_77 = arith.constant 0 : index
    %c0_78 = arith.constant 0 : index
    %205 = vector.load %arg9[%c0_77, %c0_78] : memref<8x64xf32, #tpu.memory_space<vmem>>, vector<8x64xf32>
    tpu.vector_store %arg9[%c0_77, %c0_78], %200 {strides = array<i32>} : memref<8x64xf32, #tpu.memory_space<vmem>>, vector<8x64xf32>,
    return
  }
  func.func @transform_0(%arg0: i32) -> (i32, i32) {
    %c0_i32 = arith.constant 0 : i32
    %c0_i32_0 = arith.constant 0 : i32
    %c0_i32_1 = arith.constant 0 : i32
    return %c0_i32, %c0_i32_0 : i32, i32
  }
  func.func @transform_1(%arg0: i32) -> (i32, i32, i32) {
    %c0_i32 = arith.constant 0 : i32
    %c0_i32_0 = arith.constant 0 : i32
    %c0_i32_1 = arith.constant 0 : i32
    return %arg0, %c0_i32, %c0_i32_0 : i32, i32, i32
  }
  func.func @transform_2(%arg0: i32) -> (i32, i32, i32) {
    %c0_i32 = arith.constant 0 : i32
    %c0_i32_0 = arith.constant 0 : i32
    %c0_i32_1 = arith.constant 0 : i32
    return %arg0, %c0_i32, %c0_i32_0 : i32, i32, i32
  }
  func.func @transform_3(%arg0: i32) -> (i32, i32) {
    %c0_i32 = arith.constant 0 : i32
    %c0_i32_0 = arith.constant 0 : i32
    %c0_i32_1 = arith.constant 0 : i32
    return %c0_i32, %c0_i32_0 : i32, i32
  }
  func.func @transform_4(%arg0: i32) -> (i32, i32) {
    %c0_i32 = arith.constant 0 : i32
    %c0_i32_0 = arith.constant 0 : i32
    %c0_i32_1 = arith.constant 0 : i32
    return %c0_i32, %c0_i32_0 : i32, i32
  }
  func.func @transform_5(%arg0: i32) -> (i32, i32) {
    %c0_i32 = arith.constant 0 : i32
    %c0_i32_0 = arith.constant 0 : i32
    %c0_i32_1 = arith.constant 0 : i32
    return %c0_i32, %c0_i32_0 : i32, i32
  }
  func.func @transform_6(%arg0: i32) -> (i32, i32) {
    %c0_i32 = arith.constant 0 : i32
    %c0_i32_0 = arith.constant 0 : i32
    %c0_i32_1 = arith.constant 0 : i32
    return %c0_i32, %c0_i32_0 : i32, i32
  }
  func.func @transform_7(%arg0: i32) -> (i32, i32, i32) {
    %c0_i32 = arith.constant 0 : i32
    %c0_i32_0 = arith.constant 0 : i32
    %c0_i32_1 = arith.constant 0 : i32
    return %arg0, %c0_i32, %c0_i32_0 : i32, i32, i32
  }
}

</mosaic_0001>

<llo_original>
// kernel: tpu_custom_call.1
$region0: #{tpu_custom_call.1}
  #allocation0 [shape = 'u32[]', space=smem, size = 0x4, offset = 0x4, fixed_abs, tag = 'smem constant byte address 0x4 - core index']
  #allocation1 [shape = 'u32[72,128]{1,0:T(1,128)}', space=vmem, size = 0x9000, scoped, tag = 'internal scratch']
  #allocation2 [shape = 'f32[8,64]{1,0:T(8,128)}', space=vmem, size = 0x1000, scoped, tag = 'scratch operand']
  #allocation3 [shape = 'f32[8,8,128]{2,1,0:T(8,128)}', space=vmem, size = 0x8000, scoped, tag = 'scratch operand']
  %s0 = inlined_call_operand.hbm [shape: f32[8,64], index: 0, kind: input, shape index: {}]
  %s1 = inlined_call_operand.hbm [shape: f32[8,8,32], index: 1, kind: input, shape index: {}]
  %s2 = inlined_call_operand.hbm [shape: f32[8,8,128], index: 2, kind: input, shape index: {}]
  %s3 = inlined_call_operand.hbm [shape: bf16[32,128], index: 3, kind: input, shape index: {}]
  %s4 = inlined_call_operand.hbm [shape: bf16[128,128], index: 4, kind: input, shape index: {}]
  %s5 = inlined_call_operand.hbm [shape: bf16[64,128], index: 5, kind: input, shape index: {}]
  %s6 = inlined_call_operand.vmem [shape: f32[1,128], index: 6, kind: input, shape index: {}]
  %s7 = inlined_call_operand.hbm [shape: f32[8,8,64], index: 7, kind: output, shape index: {}]
  %s8 = sld [smem:[#allocation0]]
  $region66: #{tpu_custom_call.1} parent=0
    _
  %s10 = ssub.s32 1, %s8
  %s11 = scalar_select 0, %s10, %s8
  $region1: #{tpu_custom_call.1} parent=0
    #allocation4 [shape = 'u8[4096]{0}', space=vmem, size = 0x1000, scoped, tag = 'input window, operand 0, single buffered']
    #allocation5 [shape = 's32[1]{0}', space=sflag, size = 0x4, scoped, tag = 'scoped memory for tpu_custom_call.1']
    #allocation6 [shape = 's32[1]{0}', space=sflag, size = 0x4, scoped, tag = 'scoped memory for tpu_custom_call.1']
    #allocation7 [shape = 'u8[32768]{0}', space=vmem, size = 0x8000, scoped, tag = 'input window, operand 1, single buffered']
    #allocation8 [shape = 's32[1]{0}', space=sflag, size = 0x4, scoped, tag = 'scoped memory for tpu_custom_call.1']
    #allocation9 [shape = 'u8[32768]{0}', space=vmem, size = 0x8000, scoped, tag = 'input window, operand 2, single buffered']
    #allocation10 [shape = 'u8[8192]{0}', space=vmem, size = 0x2000, scoped, tag = 'input window, operand 3, single buffered']
    #allocation11 [shape = 's32[1]{0}', space=sflag, size = 0x4, scoped, tag = 'scoped memory for tpu_custom_call.1']
    #allocation12 [shape = 'u8[32768]{0}', space=vmem, size = 0x8000, scoped, tag = 'input window, operand 4, single buffered']
    #allocation13 [shape = 'u8[16384]{0}', space=vmem, size = 0x4000, scoped, tag = 'input window, operand 5, single buffered']
    #allocation14 [shape = 's32[1]{0}', space=sflag, size = 0x4, scoped, tag = 'scoped memory for tpu_custom_call.1']
    #allocation15 [shape = 'u8[32768]{0}', space=vmem, size = 0x8000, scoped, tag = 'output window, operand 0, single buffered']
    %12 = vsyncpa [#allocation5], 0
    %13 = vsyncpa [#allocation8], 0
    %14 = vsyncpa [#allocation11], 0
    %15 = vsyncpa [#allocation14], 0
    %16 = vsyncpa [#allocation6], 0
    // Predicated region
    $region2: #{tpu_custom_call.1} parent=1 // pred_check
      _
    $region3: #{tpu_custom_call.1} parent=1 // pred_check_branch
      %18 = sbr.rel (0) target = $region5
    $region4: #{tpu_custom_call.1} parent=1 // pred_region
      %20 = vsyncadd [#allocation5], 0
      %s22 = sshll.u32 %s0, 4
      %s23 = int_to_ptr.hbm [resolvable:$true] %s22
      %s24 = sshll.u32 [#allocation4], 4
      %s25 = int_to_ptr.vmem [resolvable:$true] %s24
      %27 = dma.hbm_to_vmem [thread:$0]  %s23, 128, %s25, [#allocation5]
    $region5: #{tpu_custom_call.1} parent=1 // pred_fallthru
      _
    // Predicated region
    $region6: #{tpu_custom_call.1} parent=1 // pred_check
      _
    $region7: #{tpu_custom_call.1} parent=1 // pred_check_branch
      %29 = sbr.rel (0) target = $region9
    $region8: #{tpu_custom_call.1} parent=1 // pred_region
      %31 = vsyncadd [#allocation8], 0
      %s32 = sshll.u32 %s1, 4
      %s33 = int_to_ptr.hbm [resolvable:$true] %s32
      %s34 = sshll.u32 [#allocation7], 4
      %s35 = int_to_ptr.vmem [resolvable:$true] %s34
      %40 = dma.hbm_to_vmem [thread:$0]  %s33, 1024, %s35, [#allocation8], 128, 128, 8
    $region9: #{tpu_custom_call.1} parent=1 // pred_fallthru
      _
    // Predicated region
    $region10: #{tpu_custom_call.1} parent=1 // pred_check
      _
    $region11: #{tpu_custom_call.1} parent=1 // pred_check_branch
      %42 = sbr.rel (0) target = $region13
    $region12: #{tpu_custom_call.1} parent=1 // pred_region
      %44 = vsyncadd [#allocation8], 0
      %s45 = sshll.u32 %s2, 4
      %s46 = int_to_ptr.hbm [resolvable:$true] %s45
      %s47 = sshll.u32 [#allocation9], 4
      %s48 = int_to_ptr.vmem [resolvable:$true] %s47
      %53 = dma.hbm_to_vmem [thread:$0]  %s46, 1024, %s48, [#allocation8], 128, 128, 8
    $region13: #{tpu_custom_call.1} parent=1 // pred_fallthru
      _
    // Predicated region
    $region14: #{tpu_custom_call.1} parent=1 // pred_check
      _
    $region15: #{tpu_custom_call.1} parent=1 // pred_check_branch
      %55 = sbr.rel (0) target = $region17
    $region16: #{tpu_custom_call.1} parent=1 // pred_region
      %57 = vsyncadd [#allocation11], 0
      %s58 = sshll.u32 %s3, 4
      %s59 = int_to_ptr.hbm [resolvable:$true] %s58
      %s60 = sshll.u32 [#allocation10], 4
      %s61 = int_to_ptr.vmem [resolvable:$true] %s60
      %66 = dma.hbm_to_vmem [thread:$0]  %s59, 256, %s61, [#allocation11], 64, 64, 4
    $region17: #{tpu_custom_call.1} parent=1 // pred_fallthru
      _
    // Predicated region
    $region18: #{tpu_custom_call.1} parent=1 // pred_check
      _
    $region19: #{tpu_custom_call.1} parent=1 // pred_check_branch
      %68 = sbr.rel (0) target = $region21
    $region20: #{tpu_custom_call.1} parent=1 // pred_region
      %70 = vsyncadd [#allocation11], 0
      %s71 = sshll.u32 %s4, 4
      %s72 = int_to_ptr.hbm [resolvable:$true] %s71
      %s73 = sshll.u32 [#allocation12], 4
      %s74 = int_to_ptr.vmem [resolvable:$true] %s73
      %79 = dma.hbm_to_vmem [thread:$0]  %s72, 1024, %s74, [#allocation11], 64, 64, 4
    $region21: #{tpu_custom_call.1} parent=1 // pred_fallthru
      _
    // Predicated region
    $region22: #{tpu_custom_call.1} parent=1 // pred_check
      _
    $region23: #{tpu_custom_call.1} parent=1 // pred_check_branch
      %81 = sbr.rel (0) target = $region25
    $region24: #{tpu_custom_call.1} parent=1 // pred_region
      %83 = vsyncadd [#allocation14], 0
      %s84 = sshll.u32 %s5, 4
      %s85 = int_to_ptr.hbm [resolvable:$true] %s84
      %s86 = sshll.u32 [#allocation13], 4
      %s87 = int_to_ptr.vmem [resolvable:$true] %s86
      %92 = dma.hbm_to_vmem [thread:$0]  %s85, 512, %s87, [#allocation14], 64, 64, 4
    $region25: #{tpu_custom_call.1} parent=1 // pred_fallthru
      _
    // Predicated region
    $region26: #{tpu_custom_call.1} parent=1 // pred_check
      _
    $region27: #{tpu_custom_call.1} parent=1 // pred_check_branch
      %94 = sbr.rel (0) target = $region29
    $region28: #{tpu_custom_call.1} parent=1 // pred_region
      _
    $region29: #{tpu_custom_call.1} parent=1 // pred_fallthru
      _
    // Predicated region
    $region30: #{tpu_custom_call.1} parent=1 // pred_check
      _
    $region31: #{tpu_custom_call.1} parent=1 // pred_check_branch
      %96 = sbr.rel (0) target = $region33
    $region32: #{tpu_custom_call.1} parent=1 // pred_region
      %98 = dma.done [#allocation5], 128
    $region33: #{tpu_custom_call.1} parent=1 // pred_fallthru
      _
    // Predicated region
    $region34: #{tpu_custom_call.1} parent=1 // pred_check
      _
    $region35: #{tpu_custom_call.1} parent=1 // pred_check_branch
      %100 = sbr.rel (0) target = $region37
    $region36: #{tpu_custom_call.1} parent=1 // pred_region
      %102 = dma.done [#allocation8], 1024
    $region37: #{tpu_custom_call.1} parent=1 // pred_fallthru
      _
    // Predicated region
    $region38: #{tpu_custom_call.1} parent=1 // pred_check
      _
    $region39: #{tpu_custom_call.1} parent=1 // pred_check_branch
      %104 = sbr.rel (0) target = $region41
    $region40: #{tpu_custom_call.1} parent=1 // pred_region
      %106 = dma.done [#allocation8], 1024
    $region41: #{tpu_custom_call.1} parent=1 // pred_fallthru
      _
    // Predicated region
    $region42: #{tpu_custom_call.1} parent=1 // pred_check
      _
    $region43: #{tpu_custom_call.1} parent=1 // pred_check_branch
      %108 = sbr.rel (0) target = $region45
    $region44: #{tpu_custom_call.1} parent=1 // pred_region
      %110 = dma.done [#allocation11], 256
    $region45: #{tpu_custom_call.1} parent=1 // pred_fallthru
      _
    // Predicated region
    $region46: #{tpu_custom_call.1} parent=1 // pred_check
      _
    $region47: #{tpu_custom_call.1} parent=1 // pred_check_branch
      %112 = sbr.rel (0) target = $region49
    $region48: #{tpu_custom_call.1} parent=1 // pred_region
      %114 = dma.done [#allocation11], 1024
    $region49: #{tpu_custom_call.1} parent=1 // pred_fallthru
      _
    // Predicated region
    $region50: #{tpu_custom_call.1} parent=1 // pred_check
      _
    $region51: #{tpu_custom_call.1} parent=1 // pred_check_branch
      %116 = sbr.rel (0) target = $region53
    $region52: #{tpu_custom_call.1} parent=1 // pred_region
      %118 = dma.done [#allocation14], 512
    $region53: #{tpu_custom_call.1} parent=1 // pred_fallthru
      _
    %p120 = scmp.eq.s32.totalorder 0, 0
    // Predicated region
    $region54: #{tpu_custom_call.1} parent=1 // pred_check
      %p121 = pneg %p120
    $region55: #{tpu_custom_call.1} parent=1 // pred_check_branch
      %123 = sbr.rel (%p121) target = $region57
    $region56: #{tpu_custom_call.1} parent=1 // pred_region
      %v124 = vld [vmem:[#allocation4] sm:$0xff]
      %vm125 = vcmask 523264
      %126 = vst.msk [vmem:[#allocation2] sm:$0xff] %vm125, %v124
    $region57: #{tpu_custom_call.1} parent=1 // pred_fallthru
      _
    %v127 = vld [vmem:[#allocation7] sm:$0xff]
    %v128 = vld [vmem:[#allocation7 + $0x8] sm:$0xff]
    %v129 = vld [vmem:[#allocation7 + $0x10] sm:$0xff]
    %v130 = vld [vmem:[#allocation7 + $0x18] sm:$0xff]
    %v131 = vld [vmem:[#allocation7 + $0x20] sm:$0xff]
    %v132 = vld [vmem:[#allocation7 + $0x28] sm:$0xff]
    %v133 = vld [vmem:[#allocation7 + $0x30] sm:$0xff]
    %v134 = vld [vmem:[#allocation7 + $0x38] sm:$0xff]
    %v135 = vpack.c.bf16 %v128, %v127
    %v136 = vpack.c.bf16 %v130, %v129
    %v137 = vpack.c.bf16 %v132, %v131
    %v138 = vpack.c.bf16 %v134, %v133
    %v139 = vld [vmem:[#allocation9] sm:$0xff]
    %v140 = vld [vmem:[#allocation9 + $0x8] sm:$0xff]
    %v141 = vld [vmem:[#allocation9 + $0x10] sm:$0xff]
    %v142 = vld [vmem:[#allocation9 + $0x18] sm:$0xff]
    %v143 = vld [vmem:[#allocation9 + $0x20] sm:$0xff]
    %v144 = vld [vmem:[#allocation9 + $0x28] sm:$0xff]
    %v145 = vld [vmem:[#allocation9 + $0x30] sm:$0xff]
    %v146 = vld [vmem:[#allocation9 + $0x38] sm:$0xff]
    %v147 = vpack.c.bf16 %v140, %v139
    %v148 = vpack.c.bf16 %v142, %v141
    %v149 = vpack.c.bf16 %v144, %v143
    %v150 = vpack.c.bf16 %v146, %v145
    %v151 = vld [vmem:[#allocation10] sm:$0xf]
    %v152 = vld [vmem:[#allocation10 + $0x4] sm:$0xf]
    %v153 = vld [vmem:[#allocation10 + $0x8] sm:$0xf]
    %v154 = vld [vmem:[#allocation10 + $0xc] sm:$0xf]
    %v155 = vld [vmem:[#allocation12] sm:$0xf]
    %v156 = vld [vmem:[#allocation12 + $0x4] sm:$0xf]
    %v157 = vld [vmem:[#allocation12 + $0x8] sm:$0xf]
    %v158 = vld [vmem:[#allocation12 + $0xc] sm:$0xf]
    %v159 = vld [vmem:[#allocation12 + $0x10] sm:$0xf]
    %v160 = vld [vmem:[#allocation12 + $0x14] sm:$0xf]
    %v161 = vld [vmem:[#allocation12 + $0x18] sm:$0xf]
    %v162 = vld [vmem:[#allocation12 + $0x1c] sm:$0xf]
    %v163 = vld [vmem:[#allocation12 + $0x20] sm:$0xf]
    %v164 = vld [vmem:[#allocation12 + $0x24] sm:$0xf]
    %v165 = vld [vmem:[#allocation12 + $0x28] sm:$0xf]
    %v166 = vld [vmem:[#allocation12 + $0x2c] sm:$0xf]
    %v167 = vld [vmem:[#allocation12 + $0x30] sm:$0xf]
    %v168 = vld [vmem:[#allocation12 + $0x34] sm:$0xf]
    %v169 = vld [vmem:[#allocation12 + $0x38] sm:$0xf]
    %v170 = vld [vmem:[#allocation12 + $0x3c] sm:$0xf]
    %v187 = vunpack.c.l.b16 %v155
    %v188 = vunpack.c.l.b16 %v156
    %v189 = vunpack.c.l.b16 %v157
    %v190 = vunpack.c.l.b16 %v158
    %v191 = vunpack.c.l.b16 %v159
    %v192 = vunpack.c.l.b16 %v160
    %v193 = vunpack.c.l.b16 %v161
    %v194 = vunpack.c.l.b16 %v162
    %v195 = vunpack.c.l.b16 %v163
    %v196 = vunpack.c.l.b16 %v164
    %v197 = vunpack.c.l.b16 %v165
    %v198 = vunpack.c.l.b16 %v166
    %v199 = vunpack.c.l.b16 %v167
    %v200 = vunpack.c.l.b16 %v168
    %v201 = vunpack.c.l.b16 %v169
    %v202 = vunpack.c.l.b16 %v170
    %v203 = vpack.c.b16 %v188, %v187
    %v204 = vpack.c.b16 %v190, %v189
    %v205 = vpack.c.b16 %v192, %v191
    %v206 = vpack.c.b16 %v194, %v193
    %v207 = vpack.c.b16 %v196, %v195
    %v208 = vpack.c.b16 %v198, %v197
    %v209 = vpack.c.b16 %v200, %v199
    %v210 = vpack.c.b16 %v202, %v201
    %219 = vmatpush.bf16.msra.mxu0 %v210
    %220 = vmatpush.bf16.msra.mxu0 %v209
    %221 = vmatpush.bf16.msra.mxu0 %v208
    %222 = vmatpush.bf16.msra.mxu0 %v207
    %223 = vmatpush.bf16.msra.mxu0 %v206
    %224 = vmatpush.bf16.msra.mxu0 %v205
    %225 = vmatpush.bf16.msra.mxu0 %v204
    %226 = vmatpush.bf16.msra.mxu0 %v203
    %227 = vmatmul.bf16.gmra.mxu0 %v147
    %v228 = vpop.f32.mrf.mxu0
    %v229 = vadd.f32 0.0, %v228
    %v230 = vpop.f32.mrf.mxu0
    %v231 = vadd.f32 0.0, %v230
    %232 = vmatmul.bf16.gmra.mxu0 %v148
    %v233 = vpop.f32.mrf.mxu0
    %v234 = vadd.f32 0.0, %v233
    %v235 = vpop.f32.mrf.mxu0
    %v236 = vadd.f32 0.0, %v235
    %237 = vmatmul.bf16.gmra.mxu0 %v149
    %v238 = vpop.f32.mrf.mxu0
    %v239 = vadd.f32 0.0, %v238
    %v240 = vpop.f32.mrf.mxu0
    %v241 = vadd.f32 0.0, %v240
    %242 = vmatmul.bf16.gmra.mxu0 %v150
    %v243 = vpop.f32.mrf.mxu0
    %v244 = vadd.f32 0.0, %v243
    %v245 = vpop.f32.mrf.mxu0
    %v246 = vadd.f32 0.0, %v245
    %247 = vdwg.mxu0
    %v252 = vunpack.c.l.b16 %v151
    %v253 = vunpack.c.l.b16 %v152
    %v254 = vunpack.c.l.b16 %v153
    %v255 = vunpack.c.l.b16 %v154
    %v256 = vpack.c.b16 %v253, %v252
    %v257 = vpack.c.b16 %v255, %v254
    %vm260 = vcmask 261120
    %v262 = vsel %vm260, %v135, 0
    %v265 = vsel %vm260, %v136, 0
    %v268 = vsel %vm260, %v137, 0
    %v271 = vsel %vm260, %v138, 0
    %273 = vmatpush.bf16.msra.mxu0 0
    %274 = vmatpush.bf16.msra.mxu0 0
    %275 = vmatpush.bf16.msra.mxu0 0
    %276 = vmatpush.bf16.msra.mxu0 0
    %277 = vmatpush.bf16.msra.mxu0 0
    %278 = vmatpush.bf16.msra.mxu0 0
    %279 = vmatpush.bf16.msra.mxu0 %v257
    %280 = vmatpush.bf16.msra.mxu0 %v256
    %281 = vmatmul.bf16.gmra.mxu0 %v262
    %v282 = vpop.f32.mrf.mxu0
    %v283 = vadd.f32 %v229, %v282
    %v284 = vpop.f32.mrf.mxu0
    %v285 = vadd.f32 %v231, %v284
    %286 = vmatmul.bf16.gmra.mxu0 %v265
    %v287 = vpop.f32.mrf.mxu0
    %v288 = vadd.f32 %v234, %v287
    %v289 = vpop.f32.mrf.mxu0
    %v290 = vadd.f32 %v236, %v289
    %291 = vmatmul.bf16.gmra.mxu0 %v268
    %v292 = vpop.f32.mrf.mxu0
    %v293 = vadd.f32 %v239, %v292
    %v294 = vpop.f32.mrf.mxu0
    %v295 = vadd.f32 %v241, %v294
    %296 = vmatmul.bf16.gmra.mxu0 %v271
    %v297 = vpop.f32.mrf.mxu0
    %v298 = vadd.f32 %v244, %v297
    %v299 = vpop.f32.mrf.mxu0
    %v300 = vadd.f32 %v246, %v299
    %301 = vdwg.mxu0
    %v302 = vld [vmem:[%s6] sm:$0x1]
    %v304 = vperm.slane %v302, 0
    %v306 = vadd.f32 %v283, %v304
    %v307 = vadd.f32 %v285, %v304
    %v308 = vadd.f32 %v288, %v304
    %v309 = vadd.f32 %v290, %v304
    %v310 = vadd.f32 %v293, %v304
    %v311 = vadd.f32 %v295, %v304
    %v312 = vadd.f32 %v298, %v304
    %v313 = vadd.f32 %v300, %v304
    %314 = vst [vmem:[#allocation3] sm:$0xff] %v306
    %315 = vst [vmem:[#allocation3 + $0x8] sm:$0xff] %v307
    %316 = vst [vmem:[#allocation3 + $0x10] sm:$0xff] %v308
    %317 = vst [vmem:[#allocation3 + $0x18] sm:$0xff] %v309
    %318 = vst [vmem:[#allocation3 + $0x20] sm:$0xff] %v310
    %319 = vst [vmem:[#allocation3 + $0x28] sm:$0xff] %v311
    %320 = vst [vmem:[#allocation3 + $0x30] sm:$0xff] %v312
    %321 = vst [vmem:[#allocation3 + $0x38] sm:$0xff] %v313
    %v322 = vld [vmem:[#allocation13] sm:$0xf]
    %v323 = vld [vmem:[#allocation13 + $0x4] sm:$0xf]
    %v324 = vld [vmem:[#allocation13 + $0x8] sm:$0xf]
    %v325 = vld [vmem:[#allocation13 + $0xc] sm:$0xf]
    %v326 = vld [vmem:[#allocation13 + $0x10] sm:$0xf]
    %v327 = vld [vmem:[#allocation13 + $0x14] sm:$0xf]
    %v328 = vld [vmem:[#allocation13 + $0x18] sm:$0xf]
    %v329 = vld [vmem:[#allocation13 + $0x1c] sm:$0xf]
    %v330 = vld [vmem:[#allocation2] sm:$0xff]
    %v331 = vld [vmem:[#allocation3] sm:$0xff]
    %v332 = vpack.c.bf16 %v330, %v330
    %v341 = vunpack.c.l.b16 %v322
    %v342 = vunpack.c.l.b16 %v323
    %v343 = vunpack.c.l.b16 %v324
    %v344 = vunpack.c.l.b16 %v325
    %v345 = vunpack.c.l.b16 %v326
    %v346 = vunpack.c.l.b16 %v327
    %v347 = vunpack.c.l.b16 %v328
    %v348 = vunpack.c.l.b16 %v329
    %v349 = vpack.c.b16 %v342, %v341
    %v350 = vpack.c.b16 %v344, %v343
    %v351 = vpack.c.b16 %v346, %v345
    %v352 = vpack.c.b16 %v348, %v347
    %vm357 = vcmask 523264
    %v359 = vsel %vm357, %v332, 0
    %361 = vmatpush.bf16.msra.mxu0 0
    %362 = vmatpush.bf16.msra.mxu0 0
    %363 = vmatpush.bf16.msra.mxu0 0
    %364 = vmatpush.bf16.msra.mxu0 0
    %365 = vmatpush.bf16.msra.mxu0 %v352
    %366 = vmatpush.bf16.msra.mxu0 %v351
    %367 = vmatpush.bf16.msra.mxu0 %v350
    %368 = vmatpush.bf16.msra.mxu0 %v349
    %369 = vmatmul.bf16.gmra.mxu0 %v359
    %v370 = vpop.f32.mrf.mxu0
    %v371 = vadd.f32 0.0, %v370
    %v372 = vpop.f32.mrf.mxu0
    %373 = vdwg.mxu0
    %v374 = vadd.f32 %v331, %v371
    %v375 = vxor.u32 %v374, 2147483648
    %v376 = vmul.f32 %v375, 1.442695
    %v377 = vpow.pop %v376
    %v378 = vadd.f32 %v377, 1.0
    %v379 = vrcp.pop %v378
    %v380 = vmul.f32 %v378, %v379
    %v381 = vsub.f32 1.0, %v380
    %v382 = vmul.f32 %v379, %v381
    %v383 = vadd.f32 %v379, %v382
    %vm384 = vweird.f32 %v378
    %vm385 = vweird.f32 %v379
    %vm386 = vmor %vm384, %vm385
    %v387 = vsel %vm386, %v379, %v383
    %v388 = vand.u32 2147483647, %v378
    %vm389 = vcmp.eq.f32.partialorder %v388, 8.507059e+37
    %v390 = vand.u32 %v378, 2147483648
    %v391 = vor.u32 1.1754944e-38, %v390
    %v392 = vsel %vm389, %v391, %v387
    %v393 = vmul.f32 1.0, %v392
    %v394 = vtanh.pop %v374
    %v395 = vsub.f32 1.0, %v393
    %v396 = vmul.f32 %v395, %v330
    %398 = vrot.lane.b32.xlu0 %v394, 64
    %v399 = vpop.permute.xlu0 %398
    %v401 = vmul.f32 %v393, %v399
    %v402 = vadd.f32 %v396, %v401
    %403 = vst.msk [vmem:[#allocation15] sm:$0xff] %vm357, %v402
    %s404 = scalar_lea.vmem [#allocation3], 8
    %v405 = vld [vmem:[%s404] sm:$0xff]
    %v406 = vpack.c.bf16 %v402, %v402
    %v408 = vsel %vm357, %v406, 0
    %410 = vmatpush.bf16.msra.mxu0 0
    %411 = vmatpush.bf16.msra.mxu0 0
    %412 = vmatpush.bf16.msra.mxu0 0
    %413 = vmatpush.bf16.msra.mxu0 0
    %414 = vmatpush.bf16.msra.mxu0 %v352
    %415 = vmatpush.bf16.msra.mxu0 %v351
    %416 = vmatpush.bf16.msra.mxu0 %v350
    %417 = vmatpush.bf16.msra.mxu0 %v349
    %418 = vmatmul.bf16.gmra.mxu0 %v408
    %v419 = vpop.f32.mrf.mxu0
    %v420 = vadd.f32 0.0, %v419
    %v421 = vpop.f32.mrf.mxu0
    %422 = vdwg.mxu0
    %v423 = vadd.f32 %v405, %v420
    %v424 = vxor.u32 %v423, 2147483648
    %v425 = vmul.f32 %v424, 1.442695
    %v426 = vpow.pop %v425
    %v427 = vadd.f32 %v426, 1.0
    %v428 = vrcp.pop %v427
    %v429 = vmul.f32 %v427, %v428
    %v430 = vsub.f32 1.0, %v429
    %v431 = vmul.f32 %v428, %v430
    %v432 = vadd.f32 %v428, %v431
    %vm433 = vweird.f32 %v427
    %vm434 = vweird.f32 %v428
    %vm435 = vmor %vm433, %vm434
    %v436 = vsel %vm435, %v428, %v432
    %v437 = vand.u32 2147483647, %v427
    %vm438 = vcmp.eq.f32.partialorder %v437, 8.507059e+37
    %v439 = vand.u32 %v427, 2147483648
    %v440 = vor.u32 1.1754944e-38, %v439
    %v441 = vsel %vm438, %v440, %v436
    %v442 = vmul.f32 1.0, %v441
    %v443 = vtanh.pop %v423
    %v444 = vsub.f32 1.0, %v442
    %v445 = vmul.f32 %v444, %v402
    %447 = vrot.lane.b32.xlu0 %v443, 64
    %v448 = vpop.permute.xlu0 %447
    %v450 = vmul.f32 %v442, %v448
    %v451 = vadd.f32 %v445, %v450
    %s452 = scalar_lea.vmem [#allocation15], 8
    %453 = vst.msk [vmem:[%s452] sm:$0xff] %vm357, %v451
    %s454 = scalar_lea.vmem [#allocation3], 16
    %v455 = vld [vmem:[%s454] sm:$0xff]
    %v456 = vpack.c.bf16 %v451, %v451
    %v458 = vsel %vm357, %v456, 0
    %460 = vmatpush.bf16.msra.mxu0 0
    %461 = vmatpush.bf16.msra.mxu0 0
    %462 = vmatpush.bf16.msra.mxu0 0
    %463 = vmatpush.bf16.msra.mxu0 0
    %464 = vmatpush.bf16.msra.mxu0 %v352
    %465 = vmatpush.bf16.msra.mxu0 %v351
    %466 = vmatpush.bf16.msra.mxu0 %v350
    %467 = vmatpush.bf16.msra.mxu0 %v349
    %468 = vmatmul.bf16.gmra.mxu0 %v458
    %v469 = vpop.f32.mrf.mxu0
    %v470 = vadd.f32 0.0, %v469
    %v471 = vpop.f32.mrf.mxu0
    %472 = vdwg.mxu0
    %v473 = vadd.f32 %v455, %v470
    %v474 = vxor.u32 %v473, 2147483648
    %v475 = vmul.f32 %v474, 1.442695
    %v476 = vpow.pop %v475
    %v477 = vadd.f32 %v476, 1.0
    %v478 = vrcp.pop %v477
    %v479 = vmul.f32 %v477, %v478
    %v480 = vsub.f32 1.0, %v479
    %v481 = vmul.f32 %v478, %v480
    %v482 = vadd.f32 %v478, %v481
    %vm483 = vweird.f32 %v477
    %vm484 = vweird.f32 %v478
    %vm485 = vmor %vm483, %vm484
    %v486 = vsel %vm485, %v478, %v482
    %v487 = vand.u32 2147483647, %v477
    %vm488 = vcmp.eq.f32.partialorder %v487, 8.507059e+37
    %v489 = vand.u32 %v477, 2147483648
    %v490 = vor.u32 1.1754944e-38, %v489
    %v491 = vsel %vm488, %v490, %v486
    %v492 = vmul.f32 1.0, %v491
    %v493 = vtanh.pop %v473
    %v494 = vsub.f32 1.0, %v492
    %v495 = vmul.f32 %v494, %v451
    %497 = vrot.lane.b32.xlu0 %v493, 64
    %v498 = vpop.permute.xlu0 %497
    %v500 = vmul.f32 %v492, %v498
    %v501 = vadd.f32 %v495, %v500
    %s502 = scalar_lea.vmem [#allocation15], 16
    %503 = vst.msk [vmem:[%s502] sm:$0xff] %vm357, %v501
    %s504 = scalar_lea.vmem [#allocation3], 24
    %v505 = vld [vmem:[%s504] sm:$0xff]
    %v506 = vpack.c.bf16 %v501, %v501
    %v508 = vsel %vm357, %v506, 0
    %510 = vmatpush.bf16.msra.mxu0 0
    %511 = vmatpush.bf16.msra.mxu0 0
    %512 = vmatpush.bf16.msra.mxu0 0
    %513 = vmatpush.bf16.msra.mxu0 0
    %514 = vmatpush.bf16.msra.mxu0 %v352
    %515 = vmatpush.bf16.msra.mxu0 %v351
    %516 = vmatpush.bf16.msra.mxu0 %v350
    %517 = vmatpush.bf16.msra.mxu0 %v349
    %518 = vmatmul.bf16.gmra.mxu0 %v508
    %v519 = vpop.f32.mrf.mxu0
    %v520 = vadd.f32 0.0, %v519
    %v521 = vpop.f32.mrf.mxu0
    %522 = vdwg.mxu0
    %v523 = vadd.f32 %v505, %v520
    %v524 = vxor.u32 %v523, 2147483648
    %v525 = vmul.f32 %v524, 1.442695
    %v526 = vpow.pop %v525
    %v527 = vadd.f32 %v526, 1.0
    %v528 = vrcp.pop %v527
    %v529 = vmul.f32 %v527, %v528
    %v530 = vsub.f32 1.0, %v529
    %v531 = vmul.f32 %v528, %v530
    %v532 = vadd.f32 %v528, %v531
    %vm533 = vweird.f32 %v527
    %vm534 = vweird.f32 %v528
    %vm535 = vmor %vm533, %vm534
    %v536 = vsel %vm535, %v528, %v532
    %v537 = vand.u32 2147483647, %v527
    %vm538 = vcmp.eq.f32.partialorder %v537, 8.507059e+37
    %v539 = vand.u32 %v527, 2147483648
    %v540 = vor.u32 1.1754944e-38, %v539
    %v541 = vsel %vm538, %v540, %v536
    %v542 = vmul.f32 1.0, %v541
    %v543 = vtanh.pop %v523
    %v544 = vsub.f32 1.0, %v542
    %v545 = vmul.f32 %v544, %v501
    %547 = vrot.lane.b32.xlu0 %v543, 64
    %v548 = vpop.permute.xlu0 %547
    %v550 = vmul.f32 %v542, %v548
    %v551 = vadd.f32 %v545, %v550
    %s552 = scalar_lea.vmem [#allocation15], 24
    %553 = vst.msk [vmem:[%s552] sm:$0xff] %vm357, %v551
    %s554 = scalar_lea.vmem [#allocation3], 32
    %v555 = vld [vmem:[%s554] sm:$0xff]
    %v556 = vpack.c.bf16 %v551, %v551
    %v558 = vsel %vm357, %v556, 0
    %560 = vmatpush.bf16.msra.mxu0 0
    %561 = vmatpush.bf16.msra.mxu0 0
    %562 = vmatpush.bf16.msra.mxu0 0
    %563 = vmatpush.bf16.msra.mxu0 0
    %564 = vmatpush.bf16.msra.mxu0 %v352
    %565 = vmatpush.bf16.msra.mxu0 %v351
    %566 = vmatpush.bf16.msra.mxu0 %v350
    %567 = vmatpush.bf16.msra.mxu0 %v349
    %568 = vmatmul.bf16.gmra.mxu0 %v558
    %v569 = vpop.f32.mrf.mxu0
    %v570 = vadd.f32 0.0, %v569
    %v571 = vpop.f32.mrf.mxu0
    %572 = vdwg.mxu0
    %v573 = vadd.f32 %v555, %v570
    %v574 = vxor.u32 %v573, 2147483648
    %v575 = vmul.f32 %v574, 1.442695
    %v576 = vpow.pop %v575
    %v577 = vadd.f32 %v576, 1.0
    %v578 = vrcp.pop %v577
    %v579 = vmul.f32 %v577, %v578
    %v580 = vsub.f32 1.0, %v579
    %v581 = vmul.f32 %v578, %v580
    %v582 = vadd.f32 %v578, %v581
    %vm583 = vweird.f32 %v577
    %vm584 = vweird.f32 %v578
    %vm585 = vmor %vm583, %vm584
    %v586 = vsel %vm585, %v578, %v582
    %v587 = vand.u32 2147483647, %v577
    %vm588 = vcmp.eq.f32.partialorder %v587, 8.507059e+37
    %v589 = vand.u32 %v577, 2147483648
    %v590 = vor.u32 1.1754944e-38, %v589
    %v591 = vsel %vm588, %v590, %v586
    %v592 = vmul.f32 1.0, %v591
    %v593 = vtanh.pop %v573
    %v594 = vsub.f32 1.0, %v592
    %v595 = vmul.f32 %v594, %v551
    %597 = vrot.lane.b32.xlu0 %v593, 64
    %v598 = vpop.permute.xlu0 %597
    %v600 = vmul.f32 %v592, %v598
    %v601 = vadd.f32 %v595, %v600
    %s602 = scalar_lea.vmem [#allocation15], 32
    %603 = vst.msk [vmem:[%s602] sm:$0xff] %vm357, %v601
    %s604 = scalar_lea.vmem [#allocation3], 40
    %v605 = vld [vmem:[%s604] sm:$0xff]
    %v606 = vpack.c.bf16 %v601, %v601
    %v608 = vsel %vm357, %v606, 0
    %610 = vmatpush.bf16.msra.mxu0 0
    %611 = vmatpush.bf16.msra.mxu0 0
    %612 = vmatpush.bf16.msra.mxu0 0
    %613 = vmatpush.bf16.msra.mxu0 0
    %614 = vmatpush.bf16.msra.mxu0 %v352
    %615 = vmatpush.bf16.msra.mxu0 %v351
    %616 = vmatpush.bf16.msra.mxu0 %v350
    %617 = vmatpush.bf16.msra.mxu0 %v349
    %618 = vmatmul.bf16.gmra.mxu0 %v608
    %v619 = vpop.f32.mrf.mxu0
    %v620 = vadd.f32 0.0, %v619
    %v621 = vpop.f32.mrf.mxu0
    %622 = vdwg.mxu0
    %v623 = vadd.f32 %v605, %v620
    %v624 = vxor.u32 %v623, 2147483648
    %v625 = vmul.f32 %v624, 1.442695
    %v626 = vpow.pop %v625
    %v627 = vadd.f32 %v626, 1.0
    %v628 = vrcp.pop %v627
    %v629 = vmul.f32 %v627, %v628
    %v630 = vsub.f32 1.0, %v629
    %v631 = vmul.f32 %v628, %v630
    %v632 = vadd.f32 %v628, %v631
    %vm633 = vweird.f32 %v627
    %vm634 = vweird.f32 %v628
    %vm635 = vmor %vm633, %vm634
    %v636 = vsel %vm635, %v628, %v632
    %v637 = vand.u32 2147483647, %v627
    %vm638 = vcmp.eq.f32.partialorder %v637, 8.507059e+37
    %v639 = vand.u32 %v627, 2147483648
    %v640 = vor.u32 1.1754944e-38, %v639
    %v641 = vsel %vm638, %v640, %v636
    %v642 = vmul.f32 1.0, %v641
    %v643 = vtanh.pop %v623
    %v644 = vsub.f32 1.0, %v642
    %v645 = vmul.f32 %v644, %v601
    %647 = vrot.lane.b32.xlu0 %v643, 64
    %v648 = vpop.permute.xlu0 %647
    %v650 = vmul.f32 %v642, %v648
    %v651 = vadd.f32 %v645, %v650
    %s652 = scalar_lea.vmem [#allocation15], 40
    %653 = vst.msk [vmem:[%s652] sm:$0xff] %vm357, %v651
    %s654 = scalar_lea.vmem [#allocation3], 48
    %v655 = vld [vmem:[%s654] sm:$0xff]
    %v656 = vpack.c.bf16 %v651, %v651
    %v658 = vsel %vm357, %v656, 0
    %660 = vmatpush.bf16.msra.mxu0 0
    %661 = vmatpush.bf16.msra.mxu0 0
    %662 = vmatpush.bf16.msra.mxu0 0
    %663 = vmatpush.bf16.msra.mxu0 0
    %664 = vmatpush.bf16.msra.mxu0 %v352
    %665 = vmatpush.bf16.msra.mxu0 %v351
    %666 = vmatpush.bf16.msra.mxu0 %v350
    %667 = vmatpush.bf16.msra.mxu0 %v349
    %668 = vmatmul.bf16.gmra.mxu0 %v658
    %v669 = vpop.f32.mrf.mxu0
    %v670 = vadd.f32 0.0, %v669
    %v671 = vpop.f32.mrf.mxu0
    %672 = vdwg.mxu0
    %v673 = vadd.f32 %v655, %v670
    %v674 = vxor.u32 %v673, 2147483648
    %v675 = vmul.f32 %v674, 1.442695
    %v676 = vpow.pop %v675
    %v677 = vadd.f32 %v676, 1.0
    %v678 = vrcp.pop %v677
    %v679 = vmul.f32 %v677, %v678
    %v680 = vsub.f32 1.0, %v679
    %v681 = vmul.f32 %v678, %v680
    %v682 = vadd.f32 %v678, %v681
    %vm683 = vweird.f32 %v677
    %vm684 = vweird.f32 %v678
    %vm685 = vmor %vm683, %vm684
    %v686 = vsel %vm685, %v678, %v682
    %v687 = vand.u32 2147483647, %v677
    %vm688 = vcmp.eq.f32.partialorder %v687, 8.507059e+37
    %v689 = vand.u32 %v677, 2147483648
    %v690 = vor.u32 1.1754944e-38, %v689
    %v691 = vsel %vm688, %v690, %v686
    %v692 = vmul.f32 1.0, %v691
    %v693 = vtanh.pop %v673
    %v694 = vsub.f32 1.0, %v692
    %v695 = vmul.f32 %v694, %v651
    %697 = vrot.lane.b32.xlu0 %v693, 64
    %v698 = vpop.permute.xlu0 %697
    %v700 = vmul.f32 %v692, %v698
    %v701 = vadd.f32 %v695, %v700
    %s702 = scalar_lea.vmem [#allocation15], 48
    %703 = vst.msk [vmem:[%s702] sm:$0xff] %vm357, %v701
    %s704 = scalar_lea.vmem [#allocation3], 56
    %v705 = vld [vmem:[%s704] sm:$0xff]
    %v706 = vpack.c.bf16 %v701, %v701
    %v708 = vsel %vm357, %v706, 0
    %710 = vmatpush.bf16.msra.mxu0 0
    %711 = vmatpush.bf16.msra.mxu0 0
    %712 = vmatpush.bf16.msra.mxu0 0
    %713 = vmatpush.bf16.msra.mxu0 0
    %714 = vmatpush.bf16.msra.mxu0 %v352
    %715 = vmatpush.bf16.msra.mxu0 %v351
    %716 = vmatpush.bf16.msra.mxu0 %v350
    %717 = vmatpush.bf16.msra.mxu0 %v349
    %718 = vmatmul.bf16.gmra.mxu0 %v708
    %v719 = vpop.f32.mrf.mxu0
    %v720 = vadd.f32 0.0, %v719
    %v721 = vpop.f32.mrf.mxu0
    %722 = vdwg.mxu0
    %v723 = vadd.f32 %v705, %v720
    %v724 = vxor.u32 %v723, 2147483648
    %v725 = vmul.f32 %v724, 1.442695
    %v726 = vpow.pop %v725
    %v727 = vadd.f32 %v726, 1.0
    %v728 = vrcp.pop %v727
    %v729 = vmul.f32 %v727, %v728
    %v730 = vsub.f32 1.0, %v729
    %v731 = vmul.f32 %v728, %v730
    %v732 = vadd.f32 %v728, %v731
    %vm733 = vweird.f32 %v727
    %vm734 = vweird.f32 %v728
    %vm735 = vmor %vm733, %vm734
    %v736 = vsel %vm735, %v728, %v732
    %v737 = vand.u32 2147483647, %v727
    %vm738 = vcmp.eq.f32.partialorder %v737, 8.507059e+37
    %v739 = vand.u32 %v727, 2147483648
    %v740 = vor.u32 1.1754944e-38, %v739
    %v741 = vsel %vm738, %v740, %v736
    %v742 = vmul.f32 1.0, %v741
    %v743 = vtanh.pop %v723
    %v744 = vsub.f32 1.0, %v742
    %v745 = vmul.f32 %v744, %v701
    %747 = vrot.lane.b32.xlu0 %v743, 64
    %v748 = vpop.permute.xlu0 %747
    %v750 = vmul.f32 %v742, %v748
    %v751 = vadd.f32 %v745, %v750
    %s752 = scalar_lea.vmem [#allocation15], 56
    %753 = vst.msk [vmem:[%s752] sm:$0xff] %vm357, %v751
    %754 = vst.msk [vmem:[#allocation2] sm:$0xff] %vm357, %v751
    // Predicated region
    $region58: #{tpu_custom_call.1} parent=1 // pred_check
      _
    $region59: #{tpu_custom_call.1} parent=1 // pred_check_branch
      %756 = sbr.rel (0) target = $region61
    $region60: #{tpu_custom_call.1} parent=1 // pred_region
      %758 = vsyncadd [#allocation6], 0
      %s759 = sshll.u32 [#allocation15], 4
      %s760 = int_to_ptr.vmem [resolvable:$true] %s759
      %s761 = sshll.u32 %s7, 4
      %s762 = int_to_ptr.hbm [resolvable:$true] %s761
      %767 = dma.vmem_to_hbm [thread:$0]  %s760, 1024, %s762, [#allocation6], 128, 128, 8
    $region61: #{tpu_custom_call.1} parent=1 // pred_fallthru
      _
    // Predicated region
    $region62: #{tpu_custom_call.1} parent=1 // pred_check
      _
    $region63: #{tpu_custom_call.1} parent=1 // pred_check_branch
      %769 = sbr.rel (0) target = $region65
    $region64: #{tpu_custom_call.1} parent=1 // pred_region
      %771 = dma.done [#allocation6], 1024
    $region65: #{tpu_custom_call.1} parent=1 // pred_fallthru
      _
    %772 = vsyncpa [#allocation5], 1
    %773 = vsyncpa [#allocation8], 1
    %774 = vsyncpa [#allocation11], 1
    %775 = vsyncpa [#allocation14], 1
    %776 = vsyncpa [#allocation6], 1

</llo_original>
